<compile_context>
chip_gen: v5e
topology: v5e:2x2
jax: 0.10.0
libtpu: 0.0.40
codegen_flags: <defaults>
</compile_context>

<pallas_src>
import jax
import jax.numpy as jnp
from jax.experimental import pallas as pl
from jax.experimental.pallas import tpu as pltpu


def _directed_edge_decoder_kernel(idx_ref, p_ref, w2t_ref, b2_ref, o_ref):
    f32 = jnp.float32
    n_tot = p_ref.shape[1]          # N1 + N2
    tile_e = idx_ref.shape[1]       # edges per grid step

    idx = idx_ref[...]              # (2, tile_e) int32
    r = idx[0:1, :]                 # (1, tile_e): row index, in [0, N1)
    c = idx[1:2, :]                 # (1, tile_e): col index, pre-offset to [N1, N1+N2)

    # Stacked exact one-hot: two ones per column (row segment + col segment).
    iota = jax.lax.broadcasted_iota(jnp.int32, (n_tot, tile_e), 0)
    onehot = jnp.where((iota == r) | (iota == c), 1.0, 0.0).astype(f32)   # (n_tot, tile_e)

    # h^T[:, e] = p1[:, row[e]] (+b1 folded) + p2[:, col[e]]  -- one-hot gather is fp-exact.
    h_t = jnp.dot(p_ref[...], onehot, preferred_element_type=f32)         # (hid, tile_e)
    h_t = jnp.maximum(h_t, 0.0)                                           # ReLU

    # lin2 (transposed): (C, hid) @ (hid, tile_e) -> lane-dense (C, tile_e) output.
    o_ref[...] = (jnp.dot(w2t_ref[...], h_t, preferred_element_type=f32)
                  + b2_ref[...]).astype(o_ref.dtype)


def _pick_tile_e(e, max_tile_e):
    # Multiple of 128 (lane-dense index/output blocks); big enough to amortise the
    # ~0.35us/step grid overhead; capped at ~ceil(E/2) so the grid has >= 2 tiles
    # (v7x megacore sharding) without a full tile of pure padding.
    half = ((pl.cdiv(e, 2) + 127) // 128) * 128
    return max(128, min(max_tile_e, half))


def directed_edge_decoder_pallas(z1, z2, edge_index, params, *, max_tile_e=2048):
    """z1: [N1, Hin], z2: [N2, Hin] f32; edge_index: [2, E] int32 -> logits [E, C] f32."""
    w1, b1, w2, b2 = params    # w1: [2*Hin, hid] (x @ W form), b1: [hid], w2: [hid, C], b2: [C]
    n1, h_in = z1.shape
    n2, h_in2 = z2.shape
    assert h_in == h_in2
    hid = w1.shape[1]
    out_c = w2.shape[1]
    e = edge_index.shape[1]

    # Hoisted, grid-invariant W1 fold (+ b1 folded into the row half).
    p1 = (z1 @ w1[:h_in, :] + b1).T                  # (hid, N1)
    p2 = (z2 @ w1[h_in:, :]).T                       # (hid, N2)
    p = jnp.concatenate([p1, p2], axis=1)            # (hid, N1+N2), VMEM-resident
    w2t = w2.T                                       # (C, hid)
    b2c = b2.reshape(out_c, 1)                       # (C, 1)

    tile_e = _pick_tile_e(e, max_tile_e)
    assert tile_e % 128 == 0
    num_tiles = pl.cdiv(e, tile_e)
    e_pad = num_tiles * tile_e

    # Merged (2, E_pad) index operand: row in [0, N1), col pre-offset into [N1, N1+N2).
    # Padded slots point at node 0 of each half and are sliced off below.
    row = edge_index[0].astype(jnp.int32)
    col = edge_index[1].astype(jnp.int32) + n1
    if e_pad != e:
        pad = e_pad - e
        row = jnp.concatenate([row, jnp.zeros((pad,), jnp.int32)])
        col = jnp.concatenate([col, jnp.full((pad,), n1, jnp.int32)])
    idx = jnp.stack([row, col], axis=0)              # (2, e_pad)

    out_t = pl.pallas_call(
        _directed_edge_decoder_kernel,
        out_shape=jax.ShapeDtypeStruct((out_c, e_pad), jnp.float32),
        grid_spec=pltpu.PrefetchScalarGridSpec(
            num_scalar_prefetch=0,
            grid=(num_tiles,),
            in_specs=[
                pl.BlockSpec((2, tile_e), lambda i: (0, i)),        # merged edge-index tile
                pl.BlockSpec((hid, n1 + n2), lambda i: (0, 0)),     # folded p (resident)
                pl.BlockSpec((out_c, hid), lambda i: (0, 0)),       # W2^T (resident)
                pl.BlockSpec((out_c, 1), lambda i: (0, 0)),         # b2 (resident)
            ],
            out_specs=pl.BlockSpec((out_c, tile_e), lambda i: (0, i)),
        ),
        compiler_params=pltpu.CompilerParams(
            dimension_semantics=("parallel",)),
    )(idx, p, w2t, b2c)

    # (C, E_pad) -> (E, C); drop padded edge slots.  (Skip this transpose if the
    # consumer can accept a (C, E) layout.)
    return out_t[:, :e].T


def init_params(key, in_channels, hidden_channels=8, out_channels=3):
    """Deterministic params. Weights stored in x @ W form (transpose of torch)."""
    k1, k2, k3, k4 = jax.random.split(key, 4)
    s1 = 1.0 / jnp.sqrt(2.0 * in_channels)
    s2 = 1.0 / jnp.sqrt(float(hidden_channels))
    w1 = jax.random.uniform(k1, (2 * in_channels, hidden_channels), jnp.float32, -s1, s1)
    b1 = jax.random.uniform(k2, (hidden_channels,), jnp.float32, -s1, s1)
    w2 = jax.random.uniform(k3, (hidden_channels, out_channels), jnp.float32, -s2, s2)
    b2 = jax.random.uniform(k4, (out_channels,), jnp.float32, -s2, s2)
    return w1, b1, w2, b2


def directed_edge_decoder_ref(z1, z2, edge_index, params):
    """Pure-JAX reference mirroring the PyTorch forward."""
    w1, b1, w2, b2 = params
    row, col = edge_index[0], edge_index[1]
    x = jnp.concatenate([z1[row], z2[col]], axis=-1)
    x = x @ w1 + b1
    x = jnp.maximum(x, 0.0)
    return x @ w2 + b2


if __name__ == "__main__":
    in_channels = 32
    hidden_channels = 8      # module default
    out_channels = 3         # module default
    n_src, n_dst = 64, 48
    num_edges = 1024         # -> grid of 2 tiles of 512 (even & >= 2: feeds both v7x TCs)

    key = jax.random.PRNGKey(0)
    kz1, kz2, kr, kc, kp = jax.random.split(key, 5)

    z1 = jax.random.normal(kz1, (n_src, in_channels), jnp.float32)
    z2 = jax.random.normal(kz2, (n_dst, in_channels), jnp.float32)
    row = jax.random.randint(kr, (num_edges,), 0, n_src, jnp.int32)
    col = jax.random.randint(kc, (num_edges,), 0, n_dst, jnp.int32)
    edge_index = jnp.stack([row, col], axis=0)
    params = init_params(kp, in_channels, hidden_channels, out_channels)

    out = directed_edge_decoder_pallas(z1, z2, edge_index, params)
    out = jax.block_until_ready(out)

    ref = directed_edge_decoder_ref(z1, z2, edge_index, params)
    assert out.shape == (num_edges, out_channels)
    assert jnp.allclose(out, ref, atol=1e-5, rtol=1e-5), "mismatch vs reference"

    print("KERNEL_OK")
</pallas_src>

<mosaic_0001>
module attributes {stable_mosaic.version = 11 : i64} {
  func.func @_directed_edge_decoder_kernel(%arg0: i32, %arg1: memref<2x512xi32, #tpu.memory_space<vmem>>, %arg2: memref<8x112xf32, #tpu.memory_space<vmem>>, %arg3: memref<3x8xf32, #tpu.memory_space<vmem>>, %arg4: memref<3x1xf32, #tpu.memory_space<vmem>>, %arg5: memref<3x512xf32, #tpu.memory_space<vmem>>) attributes {dimension_semantics = [#tpu.dimension_semantics<parallel>], iteration_bounds = array<i64: 2>, scalar_prefetch = 0 : i64, scratch_operands = 0 : i64, tpu.core_type = #tpu.core_type<tc>, window_params = [{transform_indices = @transform_0, window_bounds = array<i64: 2, 512>}, {pipeline_mode = #tpu.pipeline_mode<synchronous>, transform_indices = @transform_1, window_bounds = array<i64: 8, 112>}, {pipeline_mode = #tpu.pipeline_mode<synchronous>, transform_indices = @transform_2, window_bounds = array<i64: 3, 8>}, {pipeline_mode = #tpu.pipeline_mode<synchronous>, transform_indices = @transform_3, window_bounds = array<i64: 3, 1>}, {transform_indices = @transform_4, window_bounds = array<i64: 3, 512>}]} {
    %c0 = arith.constant 0 : index
    %c0_0 = arith.constant 0 : index
    %0 = vector.load %arg1[%c0, %c0_0] : memref<2x512xi32, #tpu.memory_space<vmem>>, vector<2x512xi32>
    %1 = vector.extract_strided_slice %0 {offsets = [0, 0], sizes = [1, 512], strides = [1, 1]} : vector<2x512xi32> to vector<1x512xi32>
    %2 = vector.extract_strided_slice %0 {offsets = [1, 0], sizes = [1, 512], strides = [1, 1]} : vector<2x512xi32> to vector<1x512xi32>
    %3 = tpu.iota {dimensions = array<i32: 0>} : vector<112x512xi32>
    %4 = vector.broadcast %1 : vector<1x512xi32> to vector<112x512xi32>
    %5 = arith.cmpi eq, %3, %4 : vector<112x512xi32>
    %6 = vector.broadcast %2 : vector<1x512xi32> to vector<112x512xi32>
    %7 = arith.cmpi eq, %3, %6 : vector<112x512xi32>
    %8 = arith.ori %5, %7 : vector<112x512xi1>
    %cst = arith.constant 1.000000e+00 : f32
    %cst_1 = arith.constant 0.000000e+00 : f32
    %9 = vector.broadcast %cst : f32 to vector<112x512xf32>
    %10 = vector.broadcast %cst_1 : f32 to vector<112x512xf32>
    %11 = arith.select %8, %9, %10 : vector<112x512xi1>, vector<112x512xf32>
    %c0_2 = arith.constant 0 : index
    %c0_3 = arith.constant 0 : index
    %12 = vector.load %arg2[%c0_2, %c0_3] : memref<8x112xf32, #tpu.memory_space<vmem>>, vector<8x112xf32>
    %cst_4 = arith.constant dense<0.000000e+00> : vector<8x512xf32>
    %13 = tpu.matmul %12, %11, %cst_4 {dimension_numbers = #tpu.dot_dimension_numbers<[1], [0], [0], [1], [0, 0, 1, 1], [], []>} : vector<8x112xf32>, vector<112x512xf32>, vector<8x512xf32> -> vector<8x512xf32>
    %cst_5 = arith.constant 0.000000e+00 : f32
    %14 = vector.broadcast %cst_5 : f32 to vector<8x512xf32>
    %15 = arith.maximumf %13, %14 : vector<8x512xf32>
    %c0_6 = arith.constant 0 : index
    %c0_7 = arith.constant 0 : index
    %16 = vector.load %arg3[%c0_6, %c0_7] : memref<3x8xf32, #tpu.memory_space<vmem>>, vector<3x8xf32>
    %cst_8 = arith.constant dense<0.000000e+00> : vector<3x512xf32>
    %17 = tpu.matmul %16, %15, %cst_8 {dimension_numbers = #tpu.dot_dimension_numbers<[1], [0], [0], [1], [0, 0, 1, 1], [], []>} : vector<3x8xf32>, vector<8x512xf32>, vector<3x512xf32> -> vector<3x512xf32>
    %c0_9 = arith.constant 0 : index
    %c0_10 = arith.constant 0 : index
    %18 = vector.load %arg4[%c0_9, %c0_10] : memref<3x1xf32, #tpu.memory_space<vmem>>, vector<3x1xf32>
    %19 = vector.broadcast %18 : vector<3x1xf32> to vector<3x512xf32>
    %20 = arith.addf %17, %19 : vector<3x512xf32>
    %c0_11 = arith.constant 0 : index
    %c0_12 = arith.constant 0 : index
    %21 = vector.load %arg5[%c0_11, %c0_12] : memref<3x512xf32, #tpu.memory_space<vmem>>, vector<3x512xf32>
    tpu.vector_store %arg5[%c0_11, %c0_12], %20 {strides = array<i32>} : memref<3x512xf32, #tpu.memory_space<vmem>>, vector<3x512xf32>,
    return
  }
  func.func @transform_0(%arg0: i32) -> (i32, i32) {
    %c0_i32 = arith.constant 0 : i32
    %c0_i32_0 = arith.constant 0 : i32
    return %c0_i32, %arg0 : i32, i32
  }
  func.func @transform_1(%arg0: i32) -> (i32, i32) {
    %c0_i32 = arith.constant 0 : i32
    %c0_i32_0 = arith.constant 0 : i32
    %c0_i32_1 = arith.constant 0 : i32
    return %c0_i32, %c0_i32_0 : i32, i32
  }
  func.func @transform_2(%arg0: i32) -> (i32, i32) {
    %c0_i32 = arith.constant 0 : i32
    %c0_i32_0 = arith.constant 0 : i32
    %c0_i32_1 = arith.constant 0 : i32
    return %c0_i32, %c0_i32_0 : i32, i32
  }
  func.func @transform_3(%arg0: i32) -> (i32, i32) {
    %c0_i32 = arith.constant 0 : i32
    %c0_i32_0 = arith.constant 0 : i32
    %c0_i32_1 = arith.constant 0 : i32
    return %c0_i32, %c0_i32_0 : i32, i32
  }
  func.func @transform_4(%arg0: i32) -> (i32, i32) {
    %c0_i32 = arith.constant 0 : i32
    %c0_i32_0 = arith.constant 0 : i32
    return %c0_i32, %arg0 : i32, i32
  }
}

</mosaic_0001>

<llo_original>
// kernel: tpu_custom_call.1
$region0: #{tpu_custom_call.1}
  #allocation0 [shape = 'u32[]', space=smem, size = 0x4, offset = 0x4, fixed_abs, tag = 'smem constant byte address 0x4 - core index']
  #allocation1 [shape = 'u32[72,128]{1,0:T(1,128)}', space=vmem, size = 0x9000, scoped, tag = 'internal scratch']
  %s0 = inlined_call_operand.hbm [shape: s32[2,1024], index: 0, kind: input, shape index: {}]
  %s1 = inlined_call_operand.hbm [shape: f32[8,112], index: 1, kind: input, shape index: {}]
  %s2 = inlined_call_operand.vmem [shape: f32[3,8], index: 2, kind: input, shape index: {}]
  %s3 = inlined_call_operand.vmem [shape: f32[3,1], index: 3, kind: input, shape index: {}]
  %s4 = inlined_call_operand.hbm [shape: f32[3,1024], index: 4, kind: output, shape index: {}]
  %s5 = sld [smem:[#allocation0]]
  $region57: #{tpu_custom_call.1} parent=0
    _
  %s7 = ssub.s32 1, %s5
  %s8 = scalar_select 0, %s7, %s5
  $region1: #{tpu_custom_call.1} parent=0
    #allocation2 [shape = 'u8[8192]{0}', space=vmem, size = 0x2000, scoped, tag = 'input window, operand 0']
    #allocation3 [shape = 's32[2]{0}', space=sflag, size = 0x8, scoped, tag = 'scoped memory for tpu_custom_call.1']
    #allocation4 [shape = 's32[2]{0}', space=sflag, size = 0x8, scoped, tag = 'scoped memory for tpu_custom_call.1']
    #allocation5 [shape = 'u8[4096]{0}', space=vmem, size = 0x1000, scoped, tag = 'input window, operand 1, single buffered']
    #allocation6 [shape = 's32[1]{0}', space=sflag, size = 0x4, scoped, tag = 'scoped memory for tpu_custom_call.1']
    #allocation7 [shape = 'u8[16384]{0}', space=vmem, size = 0x4000, scoped, tag = 'output window, operand 0']
    %9 = vsyncpa [#allocation3], 0
    %s10 = scalar_lea.sflag [#allocation3], 1
    %11 = vsyncpa %s10, 0
    %12 = vsyncpa [#allocation6], 0
    %13 = vsyncpa [#allocation4], 0
    %s14 = scalar_lea.sflag [#allocation4], 1
    %15 = vsyncpa %s14, 0
    loop: start=0, step=1, limit=4
    $region2: #{tpu_custom_call.1} parent=1 // loop_pre_header
      _
    $region3: #{tpu_custom_call.1} parent=1 // loop_header
      %s17 = sphi 0, %s21
      %p18 = scmp.ge.s32.totalorder %s17, 4
      %s27 = sphi 0, %s29
      %s30 = sphi 0, %s27
      %s31 = sphi 0, %s30
      %s47 = sphi 0, %s31
      %s51 = sphi 0, %s51
      %s53 = sphi 0, %s51
      %s54 = sphi 0, %s53
      %s68 = sphi 0, %s54
      %s72 = sphi 0, %s72
      %s74 = sphi 0, %s72
      %s75 = sphi 0, %s74
      %s89 = sphi 0, %s75
      %s93 = sphi 0, %s93
      %s95 = sphi 0, %s93
      %s96 = sphi 0, %s95
      %s110 = sphi 0, %s96
      %s116 = sphi 0, %s118
      %s119 = sphi 0, %s116
      %s120 = sphi 0, %s119
      %s136 = sphi 0, %s120
    $region4: #{tpu_custom_call.1} parent=1 // loop_header_branch
      %20 = sbr.rel (%p18) target = $region8
    $region5: #{tpu_custom_call.1} parent=1 // loop_body
      %s22 = ssub.s32 %s17, 1
      %s23 = ssub.s32 %s17, 2
      %s24 = sadd.s32 %s17, 1
      %s25 = ssub.s32 %s17, %s24
      %p26 = scmp.eq.s32.totalorder %s25, 0
      %s28 = sadd.s32 %s27, 1
      %s29 = scalar_select %p26, %s27, %s28
      %p32 = pneg %p26
      %p33 = scmp.eq.s32.totalorder %s17, 1
      %p34 = por %p32, %p33
      %p35 = scmp.ne.s32.totalorder %s27, %s30
      %p36 = scmp.eq.s32.totalorder %s17, 0
      %p37 = por %p35, %p36
      %p38 = scmp.ne.s32.totalorder %s27, %s30
      %p39 = scmp.eq.s32.totalorder %s22, 1
      %p40 = por %p38, %p39
      %p41 = scmp.ne.s32.totalorder %s30, %s31
      %p42 = scmp.eq.s32.totalorder %s22, 0
      %p43 = por %p41, %p42
      %p44 = scmp.ne.s32.totalorder %s30, %s31
      %p45 = scmp.eq.s32.totalorder %s23, 1
      %p46 = por %p44, %p45
      %p48 = scmp.ne.s32.totalorder %s31, %s47
      %p49 = scmp.eq.s32.totalorder %s23, 0
      %p50 = por %p48, %p49
      %s52 = sadd.s32 %s51, 1
      %p55 = scmp.eq.s32.totalorder %s17, 1
      %p56 = scmp.ne.s32.totalorder %s51, %s53
      %p57 = scmp.eq.s32.totalorder %s17, 0
      %p58 = por %p56, %p57
      %p59 = scmp.ne.s32.totalorder %s51, %s53
      %p60 = scmp.eq.s32.totalorder %s22, 1
      %p61 = por %p59, %p60
      %p62 = scmp.ne.s32.totalorder %s53, %s54
      %p63 = scmp.eq.s32.totalorder %s22, 0
      %p64 = por %p62, %p63
      %p65 = scmp.ne.s32.totalorder %s53, %s54
      %p66 = scmp.eq.s32.totalorder %s23, 1
      %p67 = por %p65, %p66
      %p69 = scmp.ne.s32.totalorder %s54, %s68
      %p70 = scmp.eq.s32.totalorder %s23, 0
      %p71 = por %p69, %p70
      %s73 = sadd.s32 %s72, 1
      %p76 = scmp.eq.s32.totalorder %s17, 1
      %p77 = scmp.ne.s32.totalorder %s72, %s74
      %p78 = scmp.eq.s32.totalorder %s17, 0
      %p79 = por %p77, %p78
      %p80 = scmp.ne.s32.totalorder %s72, %s74
      %p81 = scmp.eq.s32.totalorder %s22, 1
      %p82 = por %p80, %p81
      %p83 = scmp.ne.s32.totalorder %s74, %s75
      %p84 = scmp.eq.s32.totalorder %s22, 0
      %p85 = por %p83, %p84
      %p86 = scmp.ne.s32.totalorder %s74, %s75
      %p87 = scmp.eq.s32.totalorder %s23, 1
      %p88 = por %p86, %p87
      %p90 = scmp.ne.s32.totalorder %s75, %s89
      %p91 = scmp.eq.s32.totalorder %s23, 0
      %p92 = por %p90, %p91
      %s94 = sadd.s32 %s93, 1
      %p97 = scmp.eq.s32.totalorder %s17, 1
      %p98 = scmp.ne.s32.totalorder %s93, %s95
      %p99 = scmp.eq.s32.totalorder %s17, 0
      %p100 = por %p98, %p99
      %p101 = scmp.ne.s32.totalorder %s93, %s95
      %p102 = scmp.eq.s32.totalorder %s22, 1
      %p103 = por %p101, %p102
      %p104 = scmp.ne.s32.totalorder %s95, %s96
      %p105 = scmp.eq.s32.totalorder %s22, 0
      %p106 = por %p104, %p105
      %p107 = scmp.ne.s32.totalorder %s95, %s96
      %p108 = scmp.eq.s32.totalorder %s23, 1
      %p109 = por %p107, %p108
      %p111 = scmp.ne.s32.totalorder %s96, %s110
      %p112 = scmp.eq.s32.totalorder %s23, 0
      %p113 = por %p111, %p112
      %s114 = ssub.s32 %s17, %s24
      %p115 = scmp.eq.s32.totalorder %s114, 0
      %s117 = sadd.s32 %s116, 1
      %s118 = scalar_select %p115, %s116, %s117
      %p121 = pneg %p115
      %p122 = scmp.eq.s32.totalorder %s17, 1
      %p123 = por %p121, %p122
      %p124 = scmp.ne.s32.totalorder %s116, %s119
      %p125 = scmp.eq.s32.totalorder %s17, 0
      %p126 = por %p124, %p125
      %p127 = scmp.ne.s32.totalorder %s116, %s119
      %p128 = scmp.eq.s32.totalorder %s22, 1
      %p129 = por %p127, %p128
      %p130 = scmp.ne.s32.totalorder %s119, %s120
      %p131 = scmp.eq.s32.totalorder %s22, 0
      %p132 = por %p130, %p131
      %p133 = scmp.ne.s32.totalorder %s119, %s120
      %p134 = scmp.eq.s32.totalorder %s23, 1
      %p135 = por %p133, %p134
      %p137 = scmp.ne.s32.totalorder %s120, %s136
      %p138 = scmp.eq.s32.totalorder %s23, 0
      %p139 = por %p137, %p138
      %p140 = scmp.le.s32.totalorder 1, %s17
      %p141 = scmp.lt.s32.totalorder %s17, 3
      %p142 = pnand %p140, %p141
      %p143 = pneg %p142
      // Predicated region
      $region9: #{tpu_custom_call.1} parent=5 // pred_check
        _
      $region10: #{tpu_custom_call.1} parent=5 // pred_check_branch
        %145 = sbr.rel (%p142) target = $region12
      $region11: #{tpu_custom_call.1} parent=5 // pred_region
        %s146 = ssub.s32 %s17, 1
        // Predicated region
        $region13: #{tpu_custom_call.1} parent=11 // pred_check
          %p147 = pneg %p64
        $region14: #{tpu_custom_call.1} parent=11 // pred_check_branch
          %149 = sbr.rel (%p147) target = $region16
        $region15: #{tpu_custom_call.1} parent=11 // pred_region
          %151 = vsyncadd [#allocation6], 0
          %s153 = sshll.u32 %s1, 4
          %s154 = int_to_ptr.hbm [resolvable:$true] %s153
          %s155 = sshll.u32 [#allocation5], 4
          %s156 = int_to_ptr.vmem [resolvable:$true] %s155
          %158 = dma.hbm_to_vmem [thread:$0]  %s154, 128, %s156, [#allocation6]
        $region16: #{tpu_custom_call.1} parent=11 // pred_fallthru
          _
        // Predicated region
        $region17: #{tpu_custom_call.1} parent=11 // pred_check
          %p159 = pneg %p85
        $region18: #{tpu_custom_call.1} parent=11 // pred_check_branch
          %161 = sbr.rel (%p159) target = $region20
        $region19: #{tpu_custom_call.1} parent=11 // pred_region
          _
        $region20: #{tpu_custom_call.1} parent=11 // pred_fallthru
          _
        // Predicated region
        $region21: #{tpu_custom_call.1} parent=11 // pred_check
          %p162 = pneg %p106
        $region22: #{tpu_custom_call.1} parent=11 // pred_check_branch
          %164 = sbr.rel (%p162) target = $region24
        $region23: #{tpu_custom_call.1} parent=11 // pred_region
          _
        $region24: #{tpu_custom_call.1} parent=11 // pred_fallthru
          _
      $region12: #{tpu_custom_call.1} parent=5 // pred_fallthru
        _
      %p165 = scmp.lt.s32.totalorder %s17, 2
      // Predicated region
      $region25: #{tpu_custom_call.1} parent=5 // pred_check
        %p166 = pneg %p165
      $region26: #{tpu_custom_call.1} parent=5 // pred_check_branch
        %168 = sbr.rel (%p166) target = $region28
      $region27: #{tpu_custom_call.1} parent=5 // pred_region
        // Predicated region
        $region29: #{tpu_custom_call.1} parent=27 // pred_check
          %p169 = pneg %p37
        $region30: #{tpu_custom_call.1} parent=27 // pred_check_branch
          %171 = sbr.rel (%p169) target = $region32
        $region31: #{tpu_custom_call.1} parent=27 // pred_region
          %s172 = sand.u32 %s27, 1
          %s173 = scalar_lea.sflag [#allocation3], %s172
          %s174 = sand.u32 %s27, 1
          %s175 = smul.addr %s174, 8
          %s176 = scalar_lea.vmem [#allocation2], %s175
          %s177 = smul.u32 4, %s17
          %179 = vsyncadd %s173, 0
          %s180 = smul.addr %s177, 2
          %s181 = scalar_lea.hbm %s0, %s180
          %s183 = sshll.u32 %s181, 4
          %s184 = int_to_ptr.hbm [resolvable:$true] %s183
          %s185 = sshll.u32 %s176, 4
          %s186 = int_to_ptr.vmem [resolvable:$true] %s185
          %188 = dma.hbm_to_vmem [thread:$0]  %s184, 128, %s186, %s173
        $region32: #{tpu_custom_call.1} parent=27 // pred_fallthru
          _
      $region28: #{tpu_custom_call.1} parent=5 // pred_fallthru
        _
      %p189 = scmp.le.s32.totalorder 1, %s17
      %p190 = scmp.lt.s32.totalorder %s17, 3
      %p191 = pnand %p189, %p190
      %p192 = pneg %p191
      // Predicated region
      $region33: #{tpu_custom_call.1} parent=5 // pred_check
        _
      $region34: #{tpu_custom_call.1} parent=5 // pred_check_branch
        %194 = sbr.rel (%p191) target = $region36
      $region35: #{tpu_custom_call.1} parent=5 // pred_region
        %s195 = ssub.s32 %s17, 1
        %s196 = sand.u32 %s30, 1
        %s197 = scalar_lea.sflag [#allocation3], %s196
        %s198 = sand.u32 %s30, 1
        %s199 = smul.addr %s198, 8
        %s200 = scalar_lea.vmem [#allocation2], %s199
        // Predicated region
        $region37: #{tpu_custom_call.1} parent=35 // pred_check
          %p201 = pneg %p43
        $region38: #{tpu_custom_call.1} parent=35 // pred_check_branch
          %203 = sbr.rel (%p201) target = $region40
        $region39: #{tpu_custom_call.1} parent=35 // pred_region
          %205 = dma.done %s197, 128
        $region40: #{tpu_custom_call.1} parent=35 // pred_fallthru
          _
        // Predicated region
        $region41: #{tpu_custom_call.1} parent=35 // pred_check
          %p206 = pneg %p64
        $region42: #{tpu_custom_call.1} parent=35 // pred_check_branch
          %208 = sbr.rel (%p206) target = $region44
        $region43: #{tpu_custom_call.1} parent=35 // pred_region
          %210 = dma.done [#allocation6], 128
        $region44: #{tpu_custom_call.1} parent=35 // pred_fallthru
          _
        %s211 = sand.u32 %s30, 1
        %s212 = scalar_lea.sflag [#allocation3], %s211
        %s213 = sand.u32 %s30, 1
        %s214 = smul.addr %s213, 8
        %s215 = scalar_lea.vmem [#allocation2], %s214
        %p216 = pneg %p43
        %p217 = pneg %p40
        %p218 = pneg %p64
        %p219 = pneg %p61
        %p220 = pneg %p85
        %p221 = pneg %p82
        %p222 = pneg %p106
        %p223 = pneg %p103
        %p224 = pneg %p132
        %p225 = pneg %p129
        %s226 = sand.u32 %s119, 1
        %s227 = scalar_lea.sflag [#allocation4], %s226
        %s228 = sand.u32 %s119, 1
        %s229 = smul.addr %s228, 16
        %s230 = scalar_lea.vmem [#allocation7], %s229
        %s231 = smul.u32 4, %s22
        %s232 = smul.u32 4, %s22
        %v233 = vld [vmem:[%s200] sm:$0xff]
        %v234 = vlaneseq
        %v235 = vshrl.u32 %v234, 7
        %v236 = vadd.s32 %v235, 8
        %v237 = vadd.s32 %v235, 16
        %v238 = vadd.s32 %v235, 24
        %v239 = vadd.s32 %v235, 32
        %v240 = vadd.s32 %v235, 40
        %v241 = vadd.s32 %v235, 48
        %v242 = vadd.s32 %v235, 56
        %v243 = vadd.s32 %v235, 64
        %v244 = vadd.s32 %v235, 72
        %v245 = vadd.s32 %v235, 80
        %v246 = vadd.s32 %v235, 88
        %v247 = vadd.s32 %v235, 96
        %v248 = vadd.s32 %v235, 104
        %v249 = vperm.slane %v233, 0
        %v250 = vperm.slane %v233, 2
        %v251 = vperm.slane %v233, 4
        %v252 = vperm.slane %v233, 6
        %v253 = vperm.slane %v249, 0
        %v254 = vperm.slane %v250, 0
        %v255 = vperm.slane %v251, 0
        %v256 = vperm.slane %v252, 0
        %vm257 = vcmp.eq.s32.totalorder %v235, %v253
        %vm258 = vcmp.eq.s32.totalorder %v235, %v254
        %vm259 = vcmp.eq.s32.totalorder %v235, %v255
        %vm260 = vcmp.eq.s32.totalorder %v235, %v256
        %vm261 = vcmp.eq.s32.totalorder %v236, %v253
        %vm262 = vcmp.eq.s32.totalorder %v236, %v254
        %vm263 = vcmp.eq.s32.totalorder %v236, %v255
        %vm264 = vcmp.eq.s32.totalorder %v236, %v256
        %vm265 = vcmp.eq.s32.totalorder %v237, %v253
        %vm266 = vcmp.eq.s32.totalorder %v237, %v254
        %vm267 = vcmp.eq.s32.totalorder %v237, %v255
        %vm268 = vcmp.eq.s32.totalorder %v237, %v256
        %vm269 = vcmp.eq.s32.totalorder %v238, %v253
        %vm270 = vcmp.eq.s32.totalorder %v238, %v254
        %vm271 = vcmp.eq.s32.totalorder %v238, %v255
        %vm272 = vcmp.eq.s32.totalorder %v238, %v256
        %vm273 = vcmp.eq.s32.totalorder %v239, %v253
        %vm274 = vcmp.eq.s32.totalorder %v239, %v254
        %vm275 = vcmp.eq.s32.totalorder %v239, %v255
        %vm276 = vcmp.eq.s32.totalorder %v239, %v256
        %vm277 = vcmp.eq.s32.totalorder %v240, %v253
        %vm278 = vcmp.eq.s32.totalorder %v240, %v254
        %vm279 = vcmp.eq.s32.totalorder %v240, %v255
        %vm280 = vcmp.eq.s32.totalorder %v240, %v256
        %vm281 = vcmp.eq.s32.totalorder %v241, %v253
        %vm282 = vcmp.eq.s32.totalorder %v241, %v254
        %vm283 = vcmp.eq.s32.totalorder %v241, %v255
        %vm284 = vcmp.eq.s32.totalorder %v241, %v256
        %vm285 = vcmp.eq.s32.totalorder %v242, %v253
        %vm286 = vcmp.eq.s32.totalorder %v242, %v254
        %vm287 = vcmp.eq.s32.totalorder %v242, %v255
        %vm288 = vcmp.eq.s32.totalorder %v242, %v256
        %vm289 = vcmp.eq.s32.totalorder %v243, %v253
        %vm290 = vcmp.eq.s32.totalorder %v243, %v254
        %vm291 = vcmp.eq.s32.totalorder %v243, %v255
        %vm292 = vcmp.eq.s32.totalorder %v243, %v256
        %vm293 = vcmp.eq.s32.totalorder %v244, %v253
        %vm294 = vcmp.eq.s32.totalorder %v244, %v254
        %vm295 = vcmp.eq.s32.totalorder %v244, %v255
        %vm296 = vcmp.eq.s32.totalorder %v244, %v256
        %vm297 = vcmp.eq.s32.totalorder %v245, %v253
        %vm298 = vcmp.eq.s32.totalorder %v245, %v254
        %vm299 = vcmp.eq.s32.totalorder %v245, %v255
        %vm300 = vcmp.eq.s32.totalorder %v245, %v256
        %vm301 = vcmp.eq.s32.totalorder %v246, %v253
        %vm302 = vcmp.eq.s32.totalorder %v246, %v254
        %vm303 = vcmp.eq.s32.totalorder %v246, %v255
        %vm304 = vcmp.eq.s32.totalorder %v246, %v256
        %vm305 = vcmp.eq.s32.totalorder %v247, %v253
        %vm306 = vcmp.eq.s32.totalorder %v247, %v254
        %vm307 = vcmp.eq.s32.totalorder %v247, %v255
        %vm308 = vcmp.eq.s32.totalorder %v247, %v256
        %vm309 = vcmp.eq.s32.totalorder %v248, %v253
        %vm310 = vcmp.eq.s32.totalorder %v248, %v254
        %vm311 = vcmp.eq.s32.totalorder %v248, %v255
        %vm312 = vcmp.eq.s32.totalorder %v248, %v256
        %v313 = vperm.slane %v233, 1
        %v314 = vperm.slane %v233, 3
        %v315 = vperm.slane %v233, 5
        %v316 = vperm.slane %v233, 7
        %v317 = vperm.slane %v313, 1
        %v318 = vperm.slane %v314, 1
        %v319 = vperm.slane %v315, 1
        %v320 = vperm.slane %v316, 1
        %vm321 = vcmp.eq.s32.totalorder %v235, %v317
        %vm322 = vcmp.eq.s32.totalorder %v235, %v318
        %vm323 = vcmp.eq.s32.totalorder %v235, %v319
        %vm324 = vcmp.eq.s32.totalorder %v235, %v320
        %vm325 = vcmp.eq.s32.totalorder %v236, %v317
        %vm326 = vcmp.eq.s32.totalorder %v236, %v318
        %vm327 = vcmp.eq.s32.totalorder %v236, %v319
        %vm328 = vcmp.eq.s32.totalorder %v236, %v320
        %vm329 = vcmp.eq.s32.totalorder %v237, %v317
        %vm330 = vcmp.eq.s32.totalorder %v237, %v318
        %vm331 = vcmp.eq.s32.totalorder %v237, %v319
        %vm332 = vcmp.eq.s32.totalorder %v237, %v320
        %vm333 = vcmp.eq.s32.totalorder %v238, %v317
        %vm334 = vcmp.eq.s32.totalorder %v238, %v318
        %vm335 = vcmp.eq.s32.totalorder %v238, %v319
        %vm336 = vcmp.eq.s32.totalorder %v238, %v320
        %vm337 = vcmp.eq.s32.totalorder %v239, %v317
        %vm338 = vcmp.eq.s32.totalorder %v239, %v318
        %vm339 = vcmp.eq.s32.totalorder %v239, %v319
        %vm340 = vcmp.eq.s32.totalorder %v239, %v320
        %vm341 = vcmp.eq.s32.totalorder %v240, %v317
        %vm342 = vcmp.eq.s32.totalorder %v240, %v318
        %vm343 = vcmp.eq.s32.totalorder %v240, %v319
        %vm344 = vcmp.eq.s32.totalorder %v240, %v320
        %vm345 = vcmp.eq.s32.totalorder %v241, %v317
        %vm346 = vcmp.eq.s32.totalorder %v241, %v318
        %vm347 = vcmp.eq.s32.totalorder %v241, %v319
        %vm348 = vcmp.eq.s32.totalorder %v241, %v320
        %vm349 = vcmp.eq.s32.totalorder %v242, %v317
        %vm350 = vcmp.eq.s32.totalorder %v242, %v318
        %vm351 = vcmp.eq.s32.totalorder %v242, %v319
        %vm352 = vcmp.eq.s32.totalorder %v242, %v320
        %vm353 = vcmp.eq.s32.totalorder %v243, %v317
        %vm354 = vcmp.eq.s32.totalorder %v243, %v318
        %vm355 = vcmp.eq.s32.totalorder %v243, %v319
        %vm356 = vcmp.eq.s32.totalorder %v243, %v320
        %vm357 = vcmp.eq.s32.totalorder %v244, %v317
        %vm358 = vcmp.eq.s32.totalorder %v244, %v318
        %vm359 = vcmp.eq.s32.totalorder %v244, %v319
        %vm360 = vcmp.eq.s32.totalorder %v244, %v320
        %vm361 = vcmp.eq.s32.totalorder %v245, %v317
        %vm362 = vcmp.eq.s32.totalorder %v245, %v318
        %vm363 = vcmp.eq.s32.totalorder %v245, %v319
        %vm364 = vcmp.eq.s32.totalorder %v245, %v320
        %vm365 = vcmp.eq.s32.totalorder %v246, %v317
        %vm366 = vcmp.eq.s32.totalorder %v246, %v318
        %vm367 = vcmp.eq.s32.totalorder %v246, %v319
        %vm368 = vcmp.eq.s32.totalorder %v246, %v320
        %vm369 = vcmp.eq.s32.totalorder %v247, %v317
        %vm370 = vcmp.eq.s32.totalorder %v247, %v318
        %vm371 = vcmp.eq.s32.totalorder %v247, %v319
        %vm372 = vcmp.eq.s32.totalorder %v247, %v320
        %vm373 = vcmp.eq.s32.totalorder %v248, %v317
        %vm374 = vcmp.eq.s32.totalorder %v248, %v318
        %vm375 = vcmp.eq.s32.totalorder %v248, %v319
        %vm376 = vcmp.eq.s32.totalorder %v248, %v320
        %vm377 = vmor %vm257, %vm321
        %vm378 = vmor %vm258, %vm322
        %vm379 = vmor %vm259, %vm323
        %vm380 = vmor %vm260, %vm324
        %vm381 = vmor %vm261, %vm325
        %vm382 = vmor %vm262, %vm326
        %vm383 = vmor %vm263, %vm327
        %vm384 = vmor %vm264, %vm328
        %vm385 = vmor %vm265, %vm329
        %vm386 = vmor %vm266, %vm330
        %vm387 = vmor %vm267, %vm331
        %vm388 = vmor %vm268, %vm332
        %vm389 = vmor %vm269, %vm333
        %vm390 = vmor %vm270, %vm334
        %vm391 = vmor %vm271, %vm335
        %vm392 = vmor %vm272, %vm336
        %vm393 = vmor %vm273, %vm337
        %vm394 = vmor %vm274, %vm338
        %vm395 = vmor %vm275, %vm339
        %vm396 = vmor %vm276, %vm340
        %vm397 = vmor %vm277, %vm341
        %vm398 = vmor %vm278, %vm342
        %vm399 = vmor %vm279, %vm343
        %vm400 = vmor %vm280, %vm344
        %vm401 = vmor %vm281, %vm345
        %vm402 = vmor %vm282, %vm346
        %vm403 = vmor %vm283, %vm347
        %vm404 = vmor %vm284, %vm348
        %vm405 = vmor %vm285, %vm349
        %vm406 = vmor %vm286, %vm350
        %vm407 = vmor %vm287, %vm351
        %vm408 = vmor %vm288, %vm352
        %vm409 = vmor %vm289, %vm353
        %vm410 = vmor %vm290, %vm354
        %vm411 = vmor %vm291, %vm355
        %vm412 = vmor %vm292, %vm356
        %vm413 = vmor %vm293, %vm357
        %vm414 = vmor %vm294, %vm358
        %vm415 = vmor %vm295, %vm359
        %vm416 = vmor %vm296, %vm360
        %vm417 = vmor %vm297, %vm361
        %vm418 = vmor %vm298, %vm362
        %vm419 = vmor %vm299, %vm363
        %vm420 = vmor %vm300, %vm364
        %vm421 = vmor %vm301, %vm365
        %vm422 = vmor %vm302, %vm366
        %vm423 = vmor %vm303, %vm367
        %vm424 = vmor %vm304, %vm368
        %vm425 = vmor %vm305, %vm369
        %vm426 = vmor %vm306, %vm370
        %vm427 = vmor %vm307, %vm371
        %vm428 = vmor %vm308, %vm372
        %vm429 = vmor %vm309, %vm373
        %vm430 = vmor %vm310, %vm374
        %vm431 = vmor %vm311, %vm375
        %vm432 = vmor %vm312, %vm376
        %v433 = vsel %vm377, 1.0, 0.0
        %v434 = vsel %vm378, 1.0, 0.0
        %v435 = vsel %vm379, 1.0, 0.0
        %v436 = vsel %vm380, 1.0, 0.0
        %v437 = vsel %vm381, 1.0, 0.0
        %v438 = vsel %vm382, 1.0, 0.0
        %v439 = vsel %vm383, 1.0, 0.0
        %v440 = vsel %vm384, 1.0, 0.0
        %v441 = vsel %vm385, 1.0, 0.0
        %v442 = vsel %vm386, 1.0, 0.0
        %v443 = vsel %vm387, 1.0, 0.0
        %v444 = vsel %vm388, 1.0, 0.0
        %v445 = vsel %vm389, 1.0, 0.0
        %v446 = vsel %vm390, 1.0, 0.0
        %v447 = vsel %vm391, 1.0, 0.0
        %v448 = vsel %vm392, 1.0, 0.0
        %v449 = vsel %vm393, 1.0, 0.0
        %v450 = vsel %vm394, 1.0, 0.0
        %v451 = vsel %vm395, 1.0, 0.0
        %v452 = vsel %vm396, 1.0, 0.0
        %v453 = vsel %vm397, 1.0, 0.0
        %v454 = vsel %vm398, 1.0, 0.0
        %v455 = vsel %vm399, 1.0, 0.0
        %v456 = vsel %vm400, 1.0, 0.0
        %v457 = vsel %vm401, 1.0, 0.0
        %v458 = vsel %vm402, 1.0, 0.0
        %v459 = vsel %vm403, 1.0, 0.0
        %v460 = vsel %vm404, 1.0, 0.0
        %v461 = vsel %vm405, 1.0, 0.0
        %v462 = vsel %vm406, 1.0, 0.0
        %v463 = vsel %vm407, 1.0, 0.0
        %v464 = vsel %vm408, 1.0, 0.0
        %v465 = vsel %vm409, 1.0, 0.0
        %v466 = vsel %vm410, 1.0, 0.0
        %v467 = vsel %vm411, 1.0, 0.0
        %v468 = vsel %vm412, 1.0, 0.0
        %v469 = vsel %vm413, 1.0, 0.0
        %v470 = vsel %vm414, 1.0, 0.0
        %v471 = vsel %vm415, 1.0, 0.0
        %v472 = vsel %vm416, 1.0, 0.0
        %v473 = vsel %vm417, 1.0, 0.0
        %v474 = vsel %vm418, 1.0, 0.0
        %v475 = vsel %vm419, 1.0, 0.0
        %v476 = vsel %vm420, 1.0, 0.0
        %v477 = vsel %vm421, 1.0, 0.0
        %v478 = vsel %vm422, 1.0, 0.0
        %v479 = vsel %vm423, 1.0, 0.0
        %v480 = vsel %vm424, 1.0, 0.0
        %v481 = vsel %vm425, 1.0, 0.0
        %v482 = vsel %vm426, 1.0, 0.0
        %v483 = vsel %vm427, 1.0, 0.0
        %v484 = vsel %vm428, 1.0, 0.0
        %v485 = vsel %vm429, 1.0, 0.0
        %v486 = vsel %vm430, 1.0, 0.0
        %v487 = vsel %vm431, 1.0, 0.0
        %v488 = vsel %vm432, 1.0, 0.0
        %v489 = vld [vmem:[#allocation5] sm:$0xff]
        %vm490 = vcmask 916480
        %v492 = vsel %vm490, %v489, 0
        %494 = vmatpush.msra.mxu0 0.0
        %495 = vmatpush.msra.mxu0 0.0
        %496 = vmatpush.msra.mxu0 %v485
        %497 = vmatpush.msra.mxu0 %v481
        %498 = vmatpush.msra.mxu0 %v477
        %499 = vmatpush.msra.mxu0 %v473
        %500 = vmatpush.msra.mxu0 %v469
        %501 = vmatpush.msra.mxu0 %v465
        %502 = vmatpush.msra.mxu0 %v461
        %503 = vmatpush.msra.mxu0 %v457
        %504 = vmatpush.msra.mxu0 %v453
        %505 = vmatpush.msra.mxu0 %v449
        %506 = vmatpush.msra.mxu0 %v445
        %507 = vmatpush.msra.mxu0 %v441
        %508 = vmatpush.msra.mxu0 %v437
        %509 = vmatpush.msra.mxu0 %v433
        %510 = vmatmul.f32.gmra.mxu0 %v492
        %v511 = vpop.f32.mrf.mxu0
        %v512 = vadd.f32 0.0, %v511
        %513 = vdwg.mxu0
        %514 = vmatpush.msra.mxu0 0.0
        %515 = vmatpush.msra.mxu0 0.0
        %516 = vmatpush.msra.mxu0 %v486
        %517 = vmatpush.msra.mxu0 %v482
        %518 = vmatpush.msra.mxu0 %v478
        %519 = vmatpush.msra.mxu0 %v474
        %520 = vmatpush.msra.mxu0 %v470
        %521 = vmatpush.msra.mxu0 %v466
        %522 = vmatpush.msra.mxu0 %v462
        %523 = vmatpush.msra.mxu0 %v458
        %524 = vmatpush.msra.mxu0 %v454
        %525 = vmatpush.msra.mxu0 %v450
        %526 = vmatpush.msra.mxu0 %v446
        %527 = vmatpush.msra.mxu0 %v442
        %528 = vmatpush.msra.mxu0 %v438
        %529 = vmatpush.msra.mxu0 %v434
        %530 = vmatmul.f32.gmra.mxu0 %v492
        %v531 = vpop.f32.mrf.mxu0
        %v532 = vadd.f32 0.0, %v531
        %533 = vdwg.mxu0
        %534 = vmatpush.msra.mxu0 0.0
        %535 = vmatpush.msra.mxu0 0.0
        %536 = vmatpush.msra.mxu0 %v487
        %537 = vmatpush.msra.mxu0 %v483
        %538 = vmatpush.msra.mxu0 %v479
        %539 = vmatpush.msra.mxu0 %v475
        %540 = vmatpush.msra.mxu0 %v471
        %541 = vmatpush.msra.mxu0 %v467
        %542 = vmatpush.msra.mxu0 %v463
        %543 = vmatpush.msra.mxu0 %v459
        %544 = vmatpush.msra.mxu0 %v455
        %545 = vmatpush.msra.mxu0 %v451
        %546 = vmatpush.msra.mxu0 %v447
        %547 = vmatpush.msra.mxu0 %v443
        %548 = vmatpush.msra.mxu0 %v439
        %549 = vmatpush.msra.mxu0 %v435
        %550 = vmatmul.f32.gmra.mxu0 %v492
        %v551 = vpop.f32.mrf.mxu0
        %v552 = vadd.f32 0.0, %v551
        %553 = vdwg.mxu0
        %554 = vmatpush.msra.mxu0 0.0
        %555 = vmatpush.msra.mxu0 0.0
        %556 = vmatpush.msra.mxu0 %v488
        %557 = vmatpush.msra.mxu0 %v484
        %558 = vmatpush.msra.mxu0 %v480
        %559 = vmatpush.msra.mxu0 %v476
        %560 = vmatpush.msra.mxu0 %v472
        %561 = vmatpush.msra.mxu0 %v468
        %562 = vmatpush.msra.mxu0 %v464
        %563 = vmatpush.msra.mxu0 %v460
        %564 = vmatpush.msra.mxu0 %v456
        %565 = vmatpush.msra.mxu0 %v452
        %566 = vmatpush.msra.mxu0 %v448
        %567 = vmatpush.msra.mxu0 %v444
        %568 = vmatpush.msra.mxu0 %v440
        %569 = vmatpush.msra.mxu0 %v436
        %570 = vmatmul.f32.gmra.mxu0 %v492
        %v571 = vpop.f32.mrf.mxu0
        %v572 = vadd.f32 0.0, %v571
        %573 = vdwg.mxu0
        %v574 = vmax.f32 %v512, 0.0
        %v575 = vmax.f32 %v532, 0.0
        %v576 = vmax.f32 %v552, 0.0
        %v577 = vmax.f32 %v572, 0.0
        %v578 = vld [vmem:[%s2] sm:$0x7]
        %v579 = vld [vmem:[%s3] sm:$0x7]
        %581 = vset.pattern.permute.xlu0 0
        %582 = vperm.xlu0 %581, %v579
        %v583 = vpop.permute.xlu0 %582
        %vm585 = vcmask 64512
        %v587 = vsel %vm585, %v578, 0
        %589 = vmatpush.msra.mxu0 0.0
        %590 = vmatpush.msra.mxu0 0.0
        %591 = vmatpush.msra.mxu0 0.0
        %592 = vmatpush.msra.mxu0 0.0
        %593 = vmatpush.msra.mxu0 0.0
        %594 = vmatpush.msra.mxu0 0.0
        %595 = vmatpush.msra.mxu0 0.0
        %596 = vmatpush.msra.mxu0 0.0
        %597 = vmatpush.msra.mxu0 0.0
        %598 = vmatpush.msra.mxu0 0.0
        %599 = vmatpush.msra.mxu0 0.0
        %600 = vmatpush.msra.mxu0 0.0
        %601 = vmatpush.msra.mxu0 0.0
        %602 = vmatpush.msra.mxu0 0.0
        %603 = vmatpush.msra.mxu0 0.0
        %604 = vmatpush.msra.mxu0 %v574
        %605 = vmatmul.f32.gmra.mxu0 %v587
        %v606 = vpop.f32.mrf.mxu0
        %v607 = vadd.f32 %v583, %v606
        %608 = vdwg.mxu0
        %609 = vmatpush.msra.mxu0 0.0
        %610 = vmatpush.msra.mxu0 0.0
        %611 = vmatpush.msra.mxu0 0.0
        %612 = vmatpush.msra.mxu0 0.0
        %613 = vmatpush.msra.mxu0 0.0
        %614 = vmatpush.msra.mxu0 0.0
        %615 = vmatpush.msra.mxu0 0.0
        %616 = vmatpush.msra.mxu0 0.0
        %617 = vmatpush.msra.mxu0 0.0
        %618 = vmatpush.msra.mxu0 0.0
        %619 = vmatpush.msra.mxu0 0.0
        %620 = vmatpush.msra.mxu0 0.0
        %621 = vmatpush.msra.mxu0 0.0
        %622 = vmatpush.msra.mxu0 0.0
        %623 = vmatpush.msra.mxu0 0.0
        %624 = vmatpush.msra.mxu0 %v575
        %625 = vmatmul.f32.gmra.mxu0 %v587
        %v626 = vpop.f32.mrf.mxu0
        %v627 = vadd.f32 %v583, %v626
        %628 = vdwg.mxu0
        %629 = vmatpush.msra.mxu0 0.0
        %630 = vmatpush.msra.mxu0 0.0
        %631 = vmatpush.msra.mxu0 0.0
        %632 = vmatpush.msra.mxu0 0.0
        %633 = vmatpush.msra.mxu0 0.0
        %634 = vmatpush.msra.mxu0 0.0
        %635 = vmatpush.msra.mxu0 0.0
        %636 = vmatpush.msra.mxu0 0.0
        %637 = vmatpush.msra.mxu0 0.0
        %638 = vmatpush.msra.mxu0 0.0
        %639 = vmatpush.msra.mxu0 0.0
        %640 = vmatpush.msra.mxu0 0.0
        %641 = vmatpush.msra.mxu0 0.0
        %642 = vmatpush.msra.mxu0 0.0
        %643 = vmatpush.msra.mxu0 0.0
        %644 = vmatpush.msra.mxu0 %v576
        %645 = vmatmul.f32.gmra.mxu0 %v587
        %v646 = vpop.f32.mrf.mxu0
        %v647 = vadd.f32 %v583, %v646
        %648 = vdwg.mxu0
        %649 = vmatpush.msra.mxu0 0.0
        %650 = vmatpush.msra.mxu0 0.0
        %651 = vmatpush.msra.mxu0 0.0
        %652 = vmatpush.msra.mxu0 0.0
        %653 = vmatpush.msra.mxu0 0.0
        %654 = vmatpush.msra.mxu0 0.0
        %655 = vmatpush.msra.mxu0 0.0
        %656 = vmatpush.msra.mxu0 0.0
        %657 = vmatpush.msra.mxu0 0.0
        %658 = vmatpush.msra.mxu0 0.0
        %659 = vmatpush.msra.mxu0 0.0
        %660 = vmatpush.msra.mxu0 0.0
        %661 = vmatpush.msra.mxu0 0.0
        %662 = vmatpush.msra.mxu0 0.0
        %663 = vmatpush.msra.mxu0 0.0
        %664 = vmatpush.msra.mxu0 %v577
        %665 = vmatmul.f32.gmra.mxu0 %v587
        %v666 = vpop.f32.mrf.mxu0
        %v667 = vadd.f32 %v583, %v666
        %668 = vdwg.mxu0
        %v673 = vrot.slane %v627, 4
        %v674 = vrot.slane %v667, 4
        %vm675 = vcmask 1043456
        %v676 = vsel %vm675, %v607, %v673
        %v677 = vsel %vm675, %v647, %v674
        %680 = vst [vmem:[%s230] sm:$0x77] %v676
        %681 = vst [vmem:[%s230 + $0x8] sm:$0x77] %v677
        %s682 = sand.u32 %s119, 1
        %s683 = scalar_lea.sflag [#allocation4], %s682
        %s684 = sand.u32 %s119, 1
        %s685 = smul.addr %s684, 16
        %s686 = scalar_lea.vmem [#allocation7], %s685
        // Predicated region
        $region45: #{tpu_custom_call.1} parent=35 // pred_check
          %p687 = pneg %p129
        $region46: #{tpu_custom_call.1} parent=35 // pred_check_branch
          %689 = sbr.rel (%p687) target = $region48
        $region47: #{tpu_custom_call.1} parent=35 // pred_region
          %s690 = smul.u32 4, %s22
          %692 = vsyncadd %s683, 0
          %s693 = smul.addr %s690, 4
          %s694 = scalar_lea.hbm %s4, %s693
          %s696 = sshll.u32 %s686, 4
          %s697 = int_to_ptr.vmem [resolvable:$true] %s696
          %s698 = sshll.u32 %s694, 4
          %s699 = int_to_ptr.hbm [resolvable:$true] %s698
          %701 = dma.vmem_to_hbm [thread:$0]  %s697, 256, %s699, %s683
        $region48: #{tpu_custom_call.1} parent=35 // pred_fallthru
          _
      $region36: #{tpu_custom_call.1} parent=5 // pred_fallthru
        _
      %p702 = scmp.le.s32.totalorder 2, %s17
      // Predicated region
      $region49: #{tpu_custom_call.1} parent=5 // pred_check
        %p703 = pneg %p702
      $region50: #{tpu_custom_call.1} parent=5 // pred_check_branch
        %705 = sbr.rel (%p703) target = $region52
      $region51: #{tpu_custom_call.1} parent=5 // pred_region
        %s706 = ssub.s32 %s17, 2
        // Predicated region
        $region53: #{tpu_custom_call.1} parent=51 // pred_check
          %p707 = pneg %p135
        $region54: #{tpu_custom_call.1} parent=51 // pred_check_branch
          %709 = sbr.rel (%p707) target = $region56
        $region55: #{tpu_custom_call.1} parent=51 // pred_region
          %s710 = sand.u32 %s120, 1
          %s711 = scalar_lea.sflag [#allocation4], %s710
          %s712 = sand.u32 %s120, 1
          %s713 = smul.addr %s712, 16
          %s714 = scalar_lea.vmem [#allocation7], %s713
          %716 = dma.done %s711, 256
        $region56: #{tpu_custom_call.1} parent=51 // pred_fallthru
          _
      $region52: #{tpu_custom_call.1} parent=5 // pred_fallthru
        _
    $region6: #{tpu_custom_call.1} parent=1 // loop_footer
      %s21 = sadd.s32 1, %s17
    $region7: #{tpu_custom_call.1} parent=1 // loop_footer_branch
      %16 = sbr.rel target = $region3
    $region8: #{tpu_custom_call.1} parent=1 // loop_exit
      _
    %717 = vsyncpa [#allocation3], 1
    %s718 = scalar_lea.sflag [#allocation3], 1
    %719 = vsyncpa %s718, 1
    %720 = vsyncpa [#allocation6], 1
    %721 = vsyncpa [#allocation4], 1
    %s722 = scalar_lea.sflag [#allocation4], 1
    %723 = vsyncpa %s722, 1

</llo_original>
